<compile_context>
chip_gen: v6e
topology: v6e:2x2x1
jax: 0.10.0
libtpu: 0.0.40
codegen_flags: <defaults>
</compile_context>

<pallas_src>
import jax
import jax.numpy as jnp
from jax.experimental import pallas as pl
from jax.experimental.pallas import tpu as pltpu

NEG_INF = -1e30  # finite "minus infinity" for padded class logits (avoids inf-inf NaNs)
LANE = 128


# --------------------------------------------------------------------------- kernel
def net_kernel(x_ref, w1_ref, b1_ref, w2_ref, b2_ref, w3_ref, b3_ref, out_ref):
    # x arrives f32; cast to bf16 on the VPU right before the MXU (no wrapper cast).
    x = x_ref[...].astype(jnp.bfloat16)

    # linear1 + relu   (bf16 operands, f32 accumulation on the MXU)
    h = jnp.dot(x, w1_ref[...], preferred_element_type=jnp.float32)
    h = jnp.maximum(h + b1_ref[...], 0.0)

    # residual + relu(linear2)
    h2 = jnp.dot(h.astype(jnp.bfloat16), w2_ref[...],
                 preferred_element_type=jnp.float32)
    h = h + jnp.maximum(h2 + b2_ref[...], 0.0)

    # linear3 (class dim padded to 128 lanes; padded bias ~ -inf, kept f32)
    logits = jnp.dot(h.astype(jnp.bfloat16), w3_ref[...],
                     preferred_element_type=jnp.float32) + b3_ref[...]

    # log_softmax along the (padded) class dim; padded lanes contribute exp(-1e30)=0
    m = jnp.max(logits, axis=-1, keepdims=True)
    shifted = logits - m
    lse = jnp.log(jnp.sum(jnp.exp(shifted), axis=-1, keepdims=True))
    out_ref[...] = (shifted - lse).astype(out_ref.dtype)


# ------------------------------------------------------------------ one-time params
def prepare_params(w1, b1, w2, b2, w3, b3):
    """One-time parameter prep, hoisted off the per-call hot path.

    Casts matmul weights to bf16 and pads the class dimension of W3/b3 to a
    multiple of 128 lanes (zero weight columns, -1e30 bias entries).
    W*: (in, out) f32, b*: (1, out) f32.
    """
    d_in, hidden = w1.shape
    n_cls = w3.shape[1]
    c_pad = max(LANE, pl.cdiv(n_cls, LANE) * LANE)

    w3p = jnp.zeros((hidden, c_pad), jnp.float32).at[:, :n_cls].set(w3)
    b3p = jnp.full((1, c_pad), NEG_INF, jnp.float32).at[:, :n_cls].set(b3)  # keep f32

    return {
        "w1": w1.astype(jnp.bfloat16), "b1": b1.astype(jnp.float32),
        "w2": w2.astype(jnp.bfloat16), "b2": b2.astype(jnp.float32),
        "w3": w3p.astype(jnp.bfloat16), "b3": b3p,
        "d_in": d_in, "hidden": hidden, "n_cls": n_cls, "c_pad": c_pad,
    }


def _pick_block_b(B, target_steps=2, max_block=4096):
    """Batch tile: aim for ~`target_steps` grid steps (keeps both v7x TCs fed);
    one step for tiny batches; cap so VMEM never becomes a constraint."""
    if B <= 8:
        return B
    bb = min(max(pl.cdiv(B, target_steps), 8), max_block)
    return ((bb + 7) // 8) * 8


# ----------------------------------------------------------------------- forward
def net_forward_padded(x, params, *, block_b=None):
    """Preferred entry point: returns (B_pad, c_pad) f32 log-probs with the class
    dim padded to 128 lanes (columns >= n_cls are ~ -1e30). No post-call slice;
    consume directly downstream (e.g. NLL label gather / argmax over [:n_cls])."""
    B, d_in = x.shape
    assert d_in == params["d_in"]
    c_pad = params["c_pad"]

    if block_b is None:
        block_b = _pick_block_b(B)
    block_b = min(block_b, max(8, B)) if B > 8 else B
    grid_b = pl.cdiv(B, block_b)
    b_pad = grid_b * block_b
    if b_pad != B:
        x = jnp.pad(x, ((0, b_pad - B), (0, 0)))  # zero rows are benign (finite logits)

    def resident(a):  # whole array, same block every grid step -> stays VMEM-resident
        return pl.BlockSpec(a.shape, lambda i: (0,) * a.ndim)

    out = pl.pallas_call(
        net_kernel,
        out_shape=jax.ShapeDtypeStruct((b_pad, c_pad), jnp.float32),
        grid=(grid_b,),
        in_specs=[
            pl.BlockSpec((block_b, d_in), lambda i: (i, 0)),   # x: tiled over batch (f32)
            resident(params["w1"]), resident(params["b1"]),
            resident(params["w2"]), resident(params["b2"]),
            resident(params["w3"]), resident(params["b3"]),
        ],
        out_specs=pl.BlockSpec((block_b, c_pad), lambda i: (i, 0)),
        compiler_params=pltpu.CompilerParams(
            dimension_semantics=("parallel",),      # shard batch across TCs on v7x
            vmem_limit_bytes=32 * 1024 * 1024,      # plenty even at block_b=4096
        ),
    )(x, params["w1"], params["b1"], params["w2"], params["b2"],
      params["w3"], params["b3"])
    return out


def net_forward(x, params, *, block_b=None):
    """Convenience wrapper matching the PyTorch signature: (B, n_classes) f32
    log-probabilities. The slice back to n_classes is tiny but does read/write
    the output once more; prefer net_forward_padded for hot loops."""
    B = x.shape[0]
    out = net_forward_padded(x, params, block_b=block_b)
    return out[:B, :params["n_cls"]]


# --------------------------------------------------------------------- references
def init_linear(key, fan_in, fan_out):
    """Mimics nn.Linear init: U(-1/sqrt(fan_in), 1/sqrt(fan_in)).
    Returns W (fan_in, fan_out) and b (1, fan_out)."""
    kw, kb = jax.random.split(key)
    bound = 1.0 / jnp.sqrt(fan_in)
    w = jax.random.uniform(kw, (fan_in, fan_out), jnp.float32, -bound, bound)
    b = jax.random.uniform(kb, (1, fan_out), jnp.float32, -bound, bound)
    return w, b


def reference_forward_f32(x, w1, b1, w2, b2, w3, b3):
    h = jnp.maximum(x @ w1 + b1, 0.0)
    h = h + jnp.maximum(h @ w2 + b2, 0.0)
    hx = h @ w3 + b3
    return jax.nn.log_softmax(hx, axis=1)


def reference_forward_bf16(x, w1, b1, w2, b2, w3, b3):
    bf = lambda a: a.astype(jnp.bfloat16)
    h = jnp.dot(bf(x), bf(w1), preferred_element_type=jnp.float32) + b1
    h = jnp.maximum(h, 0.0)
    h2 = jnp.dot(bf(h), bf(w2), preferred_element_type=jnp.float32) + b2
    h = h + jnp.maximum(h2, 0.0)
    hx = jnp.dot(bf(h), bf(w3), preferred_element_type=jnp.float32) + b3
    return jax.nn.log_softmax(hx, axis=1)


if __name__ == "__main__":
    # Net(input_size=16, output_size=8, hidden_size=32); batch sized so the grid
    # splits into 2 steps (one per v7x TensorCore).
    B, D_IN, HIDDEN, D_OUT = 256, 16, 32, 8

    key = jax.random.PRNGKey(0)
    kx, k1, k2, k3 = jax.random.split(key, 4)

    x = jax.random.normal(kx, (B, D_IN), jnp.float32)
    w1, b1 = init_linear(k1, D_IN, HIDDEN)
    w2, b2 = init_linear(k2, HIDDEN, HIDDEN)
    w3, b3 = init_linear(k3, HIDDEN, D_OUT)

    params = prepare_params(w1, b1, w2, b2, w3, b3)   # one-time (off the hot path)

    # Padded fast path (what a training/inference loop would consume directly).
    out_pad = jax.block_until_ready(net_forward_padded(x, params))
    assert out_pad.shape == (B, 128)

    # Drop-in path with the exact PyTorch output shape.
    out = jax.block_until_ready(net_forward(x, params))
    assert out.shape == (B, D_OUT)
    assert jnp.allclose(out, out_pad[:B, :D_OUT])

    ref_bf16 = reference_forward_bf16(x, w1, b1, w2, b2, w3, b3)
    ref_f32 = reference_forward_f32(x, w1, b1, w2, b2, w3, b3)
    assert jnp.allclose(out, ref_bf16, atol=5e-3, rtol=5e-3), "mismatch vs. bf16 reference"
    assert jnp.allclose(out, ref_f32, atol=5e-2, rtol=5e-2), "mismatch vs. f32 reference"
    assert not jnp.any(jnp.isnan(out_pad)), "NaN in padded output"

    print("KERNEL_OK")
</pallas_src>

<mosaic_0001>
module attributes {stable_mosaic.version = 11 : i64} {
  func.func @net_kernel(%arg0: i32, %arg1: memref<128x16xf32, #tpu.memory_space<vmem>>, %arg2: memref<16x32xbf16, #tpu.memory_space<vmem>>, %arg3: memref<1x32xf32, #tpu.memory_space<vmem>>, %arg4: memref<32x32xbf16, #tpu.memory_space<vmem>>, %arg5: memref<1x32xf32, #tpu.memory_space<vmem>>, %arg6: memref<32x128xbf16, #tpu.memory_space<vmem>>, %arg7: memref<1x128xf32, #tpu.memory_space<vmem>>, %arg8: memref<128x128xf32, #tpu.memory_space<vmem>>) attributes {dimension_semantics = [#tpu.dimension_semantics<parallel>], iteration_bounds = array<i64: 2>, scalar_prefetch = 0 : i64, scratch_operands = 0 : i64, tpu.core_type = #tpu.core_type<tc>, window_params = [{transform_indices = @transform_0, window_bounds = array<i64: 128, 16>}, {pipeline_mode = #tpu.pipeline_mode<synchronous>, transform_indices = @transform_1, window_bounds = array<i64: 16, 32>}, {pipeline_mode = #tpu.pipeline_mode<synchronous>, transform_indices = @transform_2, window_bounds = array<i64: 1, 32>}, {pipeline_mode = #tpu.pipeline_mode<synchronous>, transform_indices = @transform_3, window_bounds = array<i64: 32, 32>}, {pipeline_mode = #tpu.pipeline_mode<synchronous>, transform_indices = @transform_4, window_bounds = array<i64: 1, 32>}, {pipeline_mode = #tpu.pipeline_mode<synchronous>, transform_indices = @transform_5, window_bounds = array<i64: 32, 128>}, {pipeline_mode = #tpu.pipeline_mode<synchronous>, transform_indices = @transform_6, window_bounds = array<i64: 1, 128>}, {transform_indices = @transform_7, window_bounds = array<i64: 128, 128>}]} {
    %c0 = arith.constant 0 : index
    %c0_0 = arith.constant 0 : index
    %0 = vector.load %arg1[%c0, %c0_0] : memref<128x16xf32, #tpu.memory_space<vmem>>, vector<128x16xf32>
    %1 = arith.truncf %0 : vector<128x16xf32> to vector<128x16xbf16>
    %c0_1 = arith.constant 0 : index
    %c0_2 = arith.constant 0 : index
    %2 = vector.load %arg2[%c0_1, %c0_2] : memref<16x32xbf16, #tpu.memory_space<vmem>>, vector<16x32xbf16>
    %cst = arith.constant dense<0.000000e+00> : vector<128x32xf32>
    %3 = tpu.matmul %1, %2, %cst {dimension_numbers = #tpu.dot_dimension_numbers<[1], [0], [0], [1], [0, 0, 1, 1], [], []>} : vector<128x16xbf16>, vector<16x32xbf16>, vector<128x32xf32> -> vector<128x32xf32>
    %c0_3 = arith.constant 0 : index
    %c0_4 = arith.constant 0 : index
    %4 = vector.load %arg3[%c0_3, %c0_4] : memref<1x32xf32, #tpu.memory_space<vmem>>, vector<1x32xf32>
    %5 = vector.broadcast %4 : vector<1x32xf32> to vector<128x32xf32>
    %6 = arith.addf %3, %5 : vector<128x32xf32>
    %cst_5 = arith.constant 0.000000e+00 : f32
    %7 = vector.broadcast %cst_5 : f32 to vector<128x32xf32>
    %8 = arith.maximumf %6, %7 : vector<128x32xf32>
    %9 = arith.truncf %8 : vector<128x32xf32> to vector<128x32xbf16>
    %c0_6 = arith.constant 0 : index
    %c0_7 = arith.constant 0 : index
    %10 = vector.load %arg4[%c0_6, %c0_7] : memref<32x32xbf16, #tpu.memory_space<vmem>>, vector<32x32xbf16>
    %cst_8 = arith.constant dense<0.000000e+00> : vector<128x32xf32>
    %11 = tpu.matmul %9, %10, %cst_8 {dimension_numbers = #tpu.dot_dimension_numbers<[1], [0], [0], [1], [0, 0, 1, 1], [], []>} : vector<128x32xbf16>, vector<32x32xbf16>, vector<128x32xf32> -> vector<128x32xf32>
    %c0_9 = arith.constant 0 : index
    %c0_10 = arith.constant 0 : index
    %12 = vector.load %arg5[%c0_9, %c0_10] : memref<1x32xf32, #tpu.memory_space<vmem>>, vector<1x32xf32>
    %13 = vector.broadcast %12 : vector<1x32xf32> to vector<128x32xf32>
    %14 = arith.addf %11, %13 : vector<128x32xf32>
    %cst_11 = arith.constant 0.000000e+00 : f32
    %15 = vector.broadcast %cst_11 : f32 to vector<128x32xf32>
    %16 = arith.maximumf %14, %15 : vector<128x32xf32>
    %17 = arith.addf %8, %16 : vector<128x32xf32>
    %18 = arith.truncf %17 : vector<128x32xf32> to vector<128x32xbf16>
    %c0_12 = arith.constant 0 : index
    %c0_13 = arith.constant 0 : index
    %19 = vector.load %arg6[%c0_12, %c0_13] : memref<32x128xbf16, #tpu.memory_space<vmem>>, vector<32x128xbf16>
    %cst_14 = arith.constant dense<0.000000e+00> : vector<128x128xf32>
    %20 = tpu.matmul %18, %19, %cst_14 {dimension_numbers = #tpu.dot_dimension_numbers<[1], [0], [0], [1], [0, 0, 1, 1], [], []>} : vector<128x32xbf16>, vector<32x128xbf16>, vector<128x128xf32> -> vector<128x128xf32>
    %c0_15 = arith.constant 0 : index
    %c0_16 = arith.constant 0 : index
    %21 = vector.load %arg7[%c0_15, %c0_16] : memref<1x128xf32, #tpu.memory_space<vmem>>, vector<1x128xf32>
    %22 = vector.broadcast %21 : vector<1x128xf32> to vector<128x128xf32>
    %23 = arith.addf %20, %22 : vector<128x128xf32>
    %cst_17 = arith.constant dense<0xFF800000> : vector<128xf32>
    %24 = vector.multi_reduction <maximumf>, %23, %cst_17 [1] : vector<128x128xf32> to vector<128xf32>
    %25 = vector.shape_cast %24 : vector<128xf32> to vector<128x1xf32>
    %26 = vector.broadcast %25 : vector<128x1xf32> to vector<128x128xf32>
    %27 = arith.subf %23, %26 : vector<128x128xf32>
    %28 = math.exp %27 : vector<128x128xf32>
    %cst_18 = arith.constant dense<0.000000e+00> : vector<128xf32>
    %29 = vector.multi_reduction <add>, %28, %cst_18 [1] : vector<128x128xf32> to vector<128xf32>
    %30 = vector.shape_cast %29 : vector<128xf32> to vector<128x1xf32>
    %31 = math.log %30 : vector<128x1xf32>
    %32 = vector.broadcast %31 : vector<128x1xf32> to vector<128x128xf32>
    %33 = arith.subf %27, %32 : vector<128x128xf32>
    %c0_19 = arith.constant 0 : index
    %c0_20 = arith.constant 0 : index
    %34 = vector.load %arg8[%c0_19, %c0_20] : memref<128x128xf32, #tpu.memory_space<vmem>>, vector<128x128xf32>
    tpu.vector_store %arg8[%c0_19, %c0_20], %33 {strides = array<i32>} : memref<128x128xf32, #tpu.memory_space<vmem>>, vector<128x128xf32>,
    return
  }
  func.func @transform_0(%arg0: i32) -> (i32, i32) {
    %c0_i32 = arith.constant 0 : i32
    %c0_i32_0 = arith.constant 0 : i32
    return %arg0, %c0_i32 : i32, i32
  }
  func.func @transform_1(%arg0: i32) -> (i32, i32) {
    %c0_i32 = arith.constant 0 : i32
    %c0_i32_0 = arith.constant 0 : i32
    %c0_i32_1 = arith.constant 0 : i32
    return %c0_i32, %c0_i32_0 : i32, i32
  }
  func.func @transform_2(%arg0: i32) -> (i32, i32) {
    %c0_i32 = arith.constant 0 : i32
    %c0_i32_0 = arith.constant 0 : i32
    %c0_i32_1 = arith.constant 0 : i32
    return %c0_i32, %c0_i32_0 : i32, i32
  }
  func.func @transform_3(%arg0: i32) -> (i32, i32) {
    %c0_i32 = arith.constant 0 : i32
    %c0_i32_0 = arith.constant 0 : i32
    %c0_i32_1 = arith.constant 0 : i32
    return %c0_i32, %c0_i32_0 : i32, i32
  }
  func.func @transform_4(%arg0: i32) -> (i32, i32) {
    %c0_i32 = arith.constant 0 : i32
    %c0_i32_0 = arith.constant 0 : i32
    %c0_i32_1 = arith.constant 0 : i32
    return %c0_i32, %c0_i32_0 : i32, i32
  }
  func.func @transform_5(%arg0: i32) -> (i32, i32) {
    %c0_i32 = arith.constant 0 : i32
    %c0_i32_0 = arith.constant 0 : i32
    %c0_i32_1 = arith.constant 0 : i32
    return %c0_i32, %c0_i32_0 : i32, i32
  }
  func.func @transform_6(%arg0: i32) -> (i32, i32) {
    %c0_i32 = arith.constant 0 : i32
    %c0_i32_0 = arith.constant 0 : i32
    %c0_i32_1 = arith.constant 0 : i32
    return %c0_i32, %c0_i32_0 : i32, i32
  }
  func.func @transform_7(%arg0: i32) -> (i32, i32) {
    %c0_i32 = arith.constant 0 : i32
    %c0_i32_0 = arith.constant 0 : i32
    return %arg0, %c0_i32 : i32, i32
  }
}

</mosaic_0001>

<llo_original>
// kernel: tpu_custom_call.1
$region0: #{tpu_custom_call.1}
  #allocation0 [shape = 'u32[]', space=smem, size = 0x4, offset = 0x4, fixed_abs, tag = 'smem constant byte address 0x4 - core index']
  #allocation1 [shape = 'u32[144,128]{1,0:T(1,128)}', space=vmem, size = 0x12000, scoped, tag = 'internal scratch']
  %s0 = inlined_call_operand.vmem [shape: f32[256,16], index: 0, kind: input, shape index: {}]
  %s1 = inlined_call_operand.vmem [shape: bf16[16,32], index: 1, kind: input, shape index: {}]
  %s2 = inlined_call_operand.vmem [shape: f32[1,32], index: 2, kind: input, shape index: {}]
  %s3 = inlined_call_operand.vmem [shape: bf16[32,32], index: 3, kind: input, shape index: {}]
  %s4 = inlined_call_operand.vmem [shape: f32[1,32], index: 4, kind: input, shape index: {}]
  %s5 = inlined_call_operand.vmem [shape: bf16[32,128], index: 5, kind: input, shape index: {}]
  %s6 = inlined_call_operand.vmem [shape: f32[1,128], index: 6, kind: input, shape index: {}]
  %s7 = inlined_call_operand.hbm [shape: f32[256,128], index: 7, kind: output, shape index: {}]
  %s8 = sld [smem:[#allocation0]]
  $region61: #{tpu_custom_call.1} parent=0
    _
  %s10 = ssub.s32 1, %s8
  %s11 = scalar_select 0, %s10, %s8
  $region1: #{tpu_custom_call.1} parent=0
    #allocation2 [shape = 'u8[131072]{0}', space=vmem, size = 0x20000, scoped, tag = 'output window, operand 0']
    #allocation3 [shape = 's32[2]{0}', space=sflag, size = 0x8, scoped, tag = 'scoped memory for tpu_custom_call.1']
    %12 = vsyncpa [#allocation3], 0
    %s13 = scalar_lea.sflag [#allocation3], 1
    %14 = vsyncpa %s13, 0
    loop: start=0, step=1, limit=4
    $region2: #{tpu_custom_call.1} parent=1 // loop_pre_header
      _
    $region3: #{tpu_custom_call.1} parent=1 // loop_header
      %s16 = sphi 0, %s20
      %p17 = scmp.ge.s32.totalorder %s16, 4
      %s26 = sphi 0, %s28
      %s29 = sphi 0, %s26
      %s30 = sphi 0, %s29
      %s46 = sphi 0, %s30
      %s50 = sphi 0, %s50
      %s52 = sphi 0, %s50
      %s53 = sphi 0, %s52
      %s67 = sphi 0, %s53
      %s71 = sphi 0, %s71
      %s73 = sphi 0, %s71
      %s74 = sphi 0, %s73
      %s88 = sphi 0, %s74
      %s92 = sphi 0, %s92
      %s94 = sphi 0, %s92
      %s95 = sphi 0, %s94
      %s109 = sphi 0, %s95
      %s113 = sphi 0, %s113
      %s115 = sphi 0, %s113
      %s116 = sphi 0, %s115
      %s130 = sphi 0, %s116
      %s134 = sphi 0, %s134
      %s136 = sphi 0, %s134
      %s137 = sphi 0, %s136
      %s151 = sphi 0, %s137
      %s155 = sphi 0, %s155
      %s157 = sphi 0, %s155
      %s158 = sphi 0, %s157
      %s172 = sphi 0, %s158
      %s178 = sphi 0, %s180
      %s181 = sphi 0, %s178
      %s182 = sphi 0, %s181
      %s198 = sphi 0, %s182
    $region4: #{tpu_custom_call.1} parent=1 // loop_header_branch
      %19 = sbr.rel (%p17) target = $region8
    $region5: #{tpu_custom_call.1} parent=1 // loop_body
      %s21 = ssub.s32 %s16, 1
      %s22 = ssub.s32 %s16, 2
      %s23 = sadd.s32 %s16, 1
      %s24 = ssub.s32 %s16, %s23
      %p25 = scmp.eq.s32.totalorder %s24, 0
      %s27 = sadd.s32 %s26, 1
      %s28 = scalar_select %p25, %s26, %s27
      %p31 = pneg %p25
      %p32 = scmp.eq.s32.totalorder %s16, 1
      %p33 = por %p31, %p32
      %p34 = scmp.ne.s32.totalorder %s26, %s29
      %p35 = scmp.eq.s32.totalorder %s16, 0
      %p36 = por %p34, %p35
      %p37 = scmp.ne.s32.totalorder %s26, %s29
      %p38 = scmp.eq.s32.totalorder %s21, 1
      %p39 = por %p37, %p38
      %p40 = scmp.ne.s32.totalorder %s29, %s30
      %p41 = scmp.eq.s32.totalorder %s21, 0
      %p42 = por %p40, %p41
      %p43 = scmp.ne.s32.totalorder %s29, %s30
      %p44 = scmp.eq.s32.totalorder %s22, 1
      %p45 = por %p43, %p44
      %p47 = scmp.ne.s32.totalorder %s30, %s46
      %p48 = scmp.eq.s32.totalorder %s22, 0
      %p49 = por %p47, %p48
      %s51 = sadd.s32 %s50, 1
      %p54 = scmp.eq.s32.totalorder %s16, 1
      %p55 = scmp.ne.s32.totalorder %s50, %s52
      %p56 = scmp.eq.s32.totalorder %s16, 0
      %p57 = por %p55, %p56
      %p58 = scmp.ne.s32.totalorder %s50, %s52
      %p59 = scmp.eq.s32.totalorder %s21, 1
      %p60 = por %p58, %p59
      %p61 = scmp.ne.s32.totalorder %s52, %s53
      %p62 = scmp.eq.s32.totalorder %s21, 0
      %p63 = por %p61, %p62
      %p64 = scmp.ne.s32.totalorder %s52, %s53
      %p65 = scmp.eq.s32.totalorder %s22, 1
      %p66 = por %p64, %p65
      %p68 = scmp.ne.s32.totalorder %s53, %s67
      %p69 = scmp.eq.s32.totalorder %s22, 0
      %p70 = por %p68, %p69
      %s72 = sadd.s32 %s71, 1
      %p75 = scmp.eq.s32.totalorder %s16, 1
      %p76 = scmp.ne.s32.totalorder %s71, %s73
      %p77 = scmp.eq.s32.totalorder %s16, 0
      %p78 = por %p76, %p77
      %p79 = scmp.ne.s32.totalorder %s71, %s73
      %p80 = scmp.eq.s32.totalorder %s21, 1
      %p81 = por %p79, %p80
      %p82 = scmp.ne.s32.totalorder %s73, %s74
      %p83 = scmp.eq.s32.totalorder %s21, 0
      %p84 = por %p82, %p83
      %p85 = scmp.ne.s32.totalorder %s73, %s74
      %p86 = scmp.eq.s32.totalorder %s22, 1
      %p87 = por %p85, %p86
      %p89 = scmp.ne.s32.totalorder %s74, %s88
      %p90 = scmp.eq.s32.totalorder %s22, 0
      %p91 = por %p89, %p90
      %s93 = sadd.s32 %s92, 1
      %p96 = scmp.eq.s32.totalorder %s16, 1
      %p97 = scmp.ne.s32.totalorder %s92, %s94
      %p98 = scmp.eq.s32.totalorder %s16, 0
      %p99 = por %p97, %p98
      %p100 = scmp.ne.s32.totalorder %s92, %s94
      %p101 = scmp.eq.s32.totalorder %s21, 1
      %p102 = por %p100, %p101
      %p103 = scmp.ne.s32.totalorder %s94, %s95
      %p104 = scmp.eq.s32.totalorder %s21, 0
      %p105 = por %p103, %p104
      %p106 = scmp.ne.s32.totalorder %s94, %s95
      %p107 = scmp.eq.s32.totalorder %s22, 1
      %p108 = por %p106, %p107
      %p110 = scmp.ne.s32.totalorder %s95, %s109
      %p111 = scmp.eq.s32.totalorder %s22, 0
      %p112 = por %p110, %p111
      %s114 = sadd.s32 %s113, 1
      %p117 = scmp.eq.s32.totalorder %s16, 1
      %p118 = scmp.ne.s32.totalorder %s113, %s115
      %p119 = scmp.eq.s32.totalorder %s16, 0
      %p120 = por %p118, %p119
      %p121 = scmp.ne.s32.totalorder %s113, %s115
      %p122 = scmp.eq.s32.totalorder %s21, 1
      %p123 = por %p121, %p122
      %p124 = scmp.ne.s32.totalorder %s115, %s116
      %p125 = scmp.eq.s32.totalorder %s21, 0
      %p126 = por %p124, %p125
      %p127 = scmp.ne.s32.totalorder %s115, %s116
      %p128 = scmp.eq.s32.totalorder %s22, 1
      %p129 = por %p127, %p128
      %p131 = scmp.ne.s32.totalorder %s116, %s130
      %p132 = scmp.eq.s32.totalorder %s22, 0
      %p133 = por %p131, %p132
      %s135 = sadd.s32 %s134, 1
      %p138 = scmp.eq.s32.totalorder %s16, 1
      %p139 = scmp.ne.s32.totalorder %s134, %s136
      %p140 = scmp.eq.s32.totalorder %s16, 0
      %p141 = por %p139, %p140
      %p142 = scmp.ne.s32.totalorder %s134, %s136
      %p143 = scmp.eq.s32.totalorder %s21, 1
      %p144 = por %p142, %p143
      %p145 = scmp.ne.s32.totalorder %s136, %s137
      %p146 = scmp.eq.s32.totalorder %s21, 0
      %p147 = por %p145, %p146
      %p148 = scmp.ne.s32.totalorder %s136, %s137
      %p149 = scmp.eq.s32.totalorder %s22, 1
      %p150 = por %p148, %p149
      %p152 = scmp.ne.s32.totalorder %s137, %s151
      %p153 = scmp.eq.s32.totalorder %s22, 0
      %p154 = por %p152, %p153
      %s156 = sadd.s32 %s155, 1
      %p159 = scmp.eq.s32.totalorder %s16, 1
      %p160 = scmp.ne.s32.totalorder %s155, %s157
      %p161 = scmp.eq.s32.totalorder %s16, 0
      %p162 = por %p160, %p161
      %p163 = scmp.ne.s32.totalorder %s155, %s157
      %p164 = scmp.eq.s32.totalorder %s21, 1
      %p165 = por %p163, %p164
      %p166 = scmp.ne.s32.totalorder %s157, %s158
      %p167 = scmp.eq.s32.totalorder %s21, 0
      %p168 = por %p166, %p167
      %p169 = scmp.ne.s32.totalorder %s157, %s158
      %p170 = scmp.eq.s32.totalorder %s22, 1
      %p171 = por %p169, %p170
      %p173 = scmp.ne.s32.totalorder %s158, %s172
      %p174 = scmp.eq.s32.totalorder %s22, 0
      %p175 = por %p173, %p174
      %s176 = ssub.s32 %s16, %s23
      %p177 = scmp.eq.s32.totalorder %s176, 0
      %s179 = sadd.s32 %s178, 1
      %s180 = scalar_select %p177, %s178, %s179
      %p183 = pneg %p177
      %p184 = scmp.eq.s32.totalorder %s16, 1
      %p185 = por %p183, %p184
      %p186 = scmp.ne.s32.totalorder %s178, %s181
      %p187 = scmp.eq.s32.totalorder %s16, 0
      %p188 = por %p186, %p187
      %p189 = scmp.ne.s32.totalorder %s178, %s181
      %p190 = scmp.eq.s32.totalorder %s21, 1
      %p191 = por %p189, %p190
      %p192 = scmp.ne.s32.totalorder %s181, %s182
      %p193 = scmp.eq.s32.totalorder %s21, 0
      %p194 = por %p192, %p193
      %p195 = scmp.ne.s32.totalorder %s181, %s182
      %p196 = scmp.eq.s32.totalorder %s22, 1
      %p197 = por %p195, %p196
      %p199 = scmp.ne.s32.totalorder %s182, %s198
      %p200 = scmp.eq.s32.totalorder %s22, 0
      %p201 = por %p199, %p200
      %p202 = scmp.le.s32.totalorder 1, %s16
      %p203 = scmp.lt.s32.totalorder %s16, 3
      %p204 = pnand %p202, %p203
      %p205 = pneg %p204
      // Predicated region
      $region9: #{tpu_custom_call.1} parent=5 // pred_check
        _
      $region10: #{tpu_custom_call.1} parent=5 // pred_check_branch
        %207 = sbr.rel (%p204) target = $region12
      $region11: #{tpu_custom_call.1} parent=5 // pred_region
        %s208 = ssub.s32 %s16, 1
        // Predicated region
        $region13: #{tpu_custom_call.1} parent=11 // pred_check
          %p209 = pneg %p63
        $region14: #{tpu_custom_call.1} parent=11 // pred_check_branch
          %211 = sbr.rel (%p209) target = $region16
        $region15: #{tpu_custom_call.1} parent=11 // pred_region
          _
        $region16: #{tpu_custom_call.1} parent=11 // pred_fallthru
          _
        // Predicated region
        $region17: #{tpu_custom_call.1} parent=11 // pred_check
          %p212 = pneg %p84
        $region18: #{tpu_custom_call.1} parent=11 // pred_check_branch
          %214 = sbr.rel (%p212) target = $region20
        $region19: #{tpu_custom_call.1} parent=11 // pred_region
          _
        $region20: #{tpu_custom_call.1} parent=11 // pred_fallthru
          _
        // Predicated region
        $region21: #{tpu_custom_call.1} parent=11 // pred_check
          %p215 = pneg %p105
        $region22: #{tpu_custom_call.1} parent=11 // pred_check_branch
          %217 = sbr.rel (%p215) target = $region24
        $region23: #{tpu_custom_call.1} parent=11 // pred_region
          _
        $region24: #{tpu_custom_call.1} parent=11 // pred_fallthru
          _
        // Predicated region
        $region25: #{tpu_custom_call.1} parent=11 // pred_check
          %p218 = pneg %p126
        $region26: #{tpu_custom_call.1} parent=11 // pred_check_branch
          %220 = sbr.rel (%p218) target = $region28
        $region27: #{tpu_custom_call.1} parent=11 // pred_region
          _
        $region28: #{tpu_custom_call.1} parent=11 // pred_fallthru
          _
        // Predicated region
        $region29: #{tpu_custom_call.1} parent=11 // pred_check
          %p221 = pneg %p147
        $region30: #{tpu_custom_call.1} parent=11 // pred_check_branch
          %223 = sbr.rel (%p221) target = $region32
        $region31: #{tpu_custom_call.1} parent=11 // pred_region
          _
        $region32: #{tpu_custom_call.1} parent=11 // pred_fallthru
          _
        // Predicated region
        $region33: #{tpu_custom_call.1} parent=11 // pred_check
          %p224 = pneg %p168
        $region34: #{tpu_custom_call.1} parent=11 // pred_check_branch
          %226 = sbr.rel (%p224) target = $region36
        $region35: #{tpu_custom_call.1} parent=11 // pred_region
          _
        $region36: #{tpu_custom_call.1} parent=11 // pred_fallthru
          _
      $region12: #{tpu_custom_call.1} parent=5 // pred_fallthru
        _
      %p227 = scmp.lt.s32.totalorder %s16, 2
      // Predicated region
      $region37: #{tpu_custom_call.1} parent=5 // pred_check
        %p228 = pneg %p227
      $region38: #{tpu_custom_call.1} parent=5 // pred_check_branch
        %230 = sbr.rel (%p228) target = $region40
      $region39: #{tpu_custom_call.1} parent=5 // pred_region
        // Predicated region
        $region41: #{tpu_custom_call.1} parent=39 // pred_check
          %p231 = pneg %p36
        $region42: #{tpu_custom_call.1} parent=39 // pred_check_branch
          %233 = sbr.rel (%p231) target = $region44
        $region43: #{tpu_custom_call.1} parent=39 // pred_region
          %s234 = smul.u32 16, %s16
          %p235 = scmp.lt.s32.totalorder %s234, 31
          %s236 = scalar_select %p235, %s234, 31
          %s237 = smul.addr %s236, 8
          %s238 = scalar_lea.vmem %s0, %s237
          %s239 = smul.u32 16, %s16
        $region44: #{tpu_custom_call.1} parent=39 // pred_fallthru
          _
      $region40: #{tpu_custom_call.1} parent=5 // pred_fallthru
        _
      %p240 = scmp.le.s32.totalorder 1, %s16
      %p241 = scmp.lt.s32.totalorder %s16, 3
      %p242 = pnand %p240, %p241
      %p243 = pneg %p242
      // Predicated region
      $region45: #{tpu_custom_call.1} parent=5 // pred_check
        _
      $region46: #{tpu_custom_call.1} parent=5 // pred_check_branch
        %245 = sbr.rel (%p242) target = $region48
      $region47: #{tpu_custom_call.1} parent=5 // pred_region
        %s246 = ssub.s32 %s16, 1
        %s247 = smul.u32 16, %s21
        %p248 = scmp.lt.s32.totalorder %s247, 31
        %s249 = scalar_select %p248, %s247, 31
        %s250 = smul.addr %s249, 8
        %s251 = scalar_lea.vmem %s0, %s250
        %p252 = pneg %p42
        %p253 = pneg %p39
        %p254 = pneg %p63
        %p255 = pneg %p60
        %p256 = pneg %p84
        %p257 = pneg %p81
        %p258 = pneg %p105
        %p259 = pneg %p102
        %p260 = pneg %p126
        %p261 = pneg %p123
        %p262 = pneg %p147
        %p263 = pneg %p144
        %p264 = pneg %p168
        %p265 = pneg %p165
        %p266 = pneg %p194
        %p267 = pneg %p191
        %s268 = sand.u32 %s181, 1
        %s269 = scalar_lea.sflag [#allocation3], %s268
        %s270 = sand.u32 %s181, 1
        %s271 = smul.addr %s270, 128
        %s272 = scalar_lea.vmem [#allocation2], %s271
        %s273 = smul.u32 16, %s21
        %p274 = scmp.lt.s32.totalorder %s273, 31
        %s275 = scalar_select %p274, %s273, 31
        %s276 = smul.addr %s275, 8
        %s277 = scalar_lea.vmem %s0, %s276
        %s278 = smul.u32 16, %s21
        %s279 = smul.u32 16, %s21
        %v281 = vld [vmem:[%s277] sm:$0xff]
        %v282 = vld [vmem:[%s277 + $0x8] sm:$0xff]
        %v283 = vld [vmem:[%s277 + $0x10] sm:$0xff]
        %v284 = vld [vmem:[%s277 + $0x18] sm:$0xff]
        %v285 = vld [vmem:[%s277 + $0x20] sm:$0xff]
        %v286 = vld [vmem:[%s277 + $0x28] sm:$0xff]
        %v287 = vld [vmem:[%s277 + $0x30] sm:$0xff]
        %v288 = vld [vmem:[%s277 + $0x38] sm:$0xff]
        %v289 = vld [vmem:[%s277 + $0x40] sm:$0xff]
        %v290 = vld [vmem:[%s277 + $0x48] sm:$0xff]
        %v291 = vld [vmem:[%s277 + $0x50] sm:$0xff]
        %v292 = vld [vmem:[%s277 + $0x58] sm:$0xff]
        %v293 = vld [vmem:[%s277 + $0x60] sm:$0xff]
        %v294 = vld [vmem:[%s277 + $0x68] sm:$0xff]
        %v295 = vld [vmem:[%s277 + $0x70] sm:$0xff]
        %v296 = vld [vmem:[%s277 + $0x78] sm:$0xff]
        %v297 = vpack.c.bf16 %v282, %v281
        %v298 = vpack.c.bf16 %v284, %v283
        %v299 = vpack.c.bf16 %v286, %v285
        %v300 = vpack.c.bf16 %v288, %v287
        %v301 = vpack.c.bf16 %v290, %v289
        %v302 = vpack.c.bf16 %v292, %v291
        %v303 = vpack.c.bf16 %v294, %v293
        %v304 = vpack.c.bf16 %v296, %v295
        %v305 = vld [vmem:[%s1] sm:$0xf]
        %v306 = vld [vmem:[%s1 + $0x4] sm:$0xf]
        %v307 = vld [vmem:[%s2] sm:$0x1]
        %v309 = vlaneseq
        %v310 = vshrl.u32 %v309, 7
        %v311 = vsub.s32 0, %v310
        %v312 = vrot.slane %v307, %v311
        %v316 = vunpack.c.l.b16 %v305
        %v317 = vunpack.c.l.b16 %v306
        %v318 = vpack.c.b16 %v317, %v316
        %vm320 = vcmask 130048
        %v322 = vsel %vm320, %v297, 0
        %v325 = vsel %vm320, %v298, 0
        %v328 = vsel %vm320, %v299, 0
        %v331 = vsel %vm320, %v300, 0
        %v334 = vsel %vm320, %v301, 0
        %v337 = vsel %vm320, %v302, 0
        %v340 = vsel %vm320, %v303, 0
        %v343 = vsel %vm320, %v304, 0
        %345 = vmatprep.subr.bf16.mxu0 0
        %346 = vmatpush1.bf16.msra.mxu0 0
        %347 = vmatprep.subr.bf16.mxu0 0
        %348 = vmatpush1.bf16.msra.mxu0 0
        %349 = vmatprep.subr.bf16.mxu0 0
        %350 = vmatpush1.bf16.msra.mxu0 0
        %351 = vmatprep.subr.bf16.mxu0 0
        %352 = vmatpush1.bf16.msra.mxu0 0
        %353 = vmatprep.subr.bf16.mxu0 0
        %354 = vmatpush1.bf16.msra.mxu0 0
        %355 = vmatprep.subr.bf16.mxu0 0
        %356 = vmatpush1.bf16.msra.mxu0 0
        %357 = vmatprep.subr.bf16.mxu0 0
        %358 = vmatpush1.bf16.msra.mxu0 0
        %359 = vmatprep.subr.bf16.mxu0 0
        %360 = vmatpush1.bf16.msra.mxu0 %v318
        %361 = vmatprep.subr.bf16.mxu0 0
        %362 = vmatpush2.bf16.msra.mxu0 0
        %363 = vmatprep.subr.bf16.mxu0 0
        %364 = vmatpush2.bf16.msra.mxu0 0
        %365 = vmatprep.subr.bf16.mxu0 0
        %366 = vmatpush2.bf16.msra.mxu0 0
        %367 = vmatprep.subr.bf16.mxu0 0
        %368 = vmatpush2.bf16.msra.mxu0 0
        %369 = vmatprep.subr.bf16.mxu0 0
        %370 = vmatpush2.bf16.msra.mxu0 0
        %371 = vmatprep.subr.bf16.mxu0 0
        %372 = vmatpush2.bf16.msra.mxu0 0
        %373 = vmatprep.subr.bf16.mxu0 0
        %374 = vmatpush2.bf16.msra.mxu0 0
        %375 = vmatprep.subr.bf16.mxu0 0
        %376 = vmatpush2.bf16.msra.mxu0 0
        %377 = vmatprep.mubr.bf16.mxu0 0
        %378 = vmatmul.mubr.bf16.gmra.mxu0 %v322
        %v379 = vpop.f32.mrf.mxu0
        %v380 = vadd.f32 %v312, %v379
        %v381 = vpop.f32.mrf.mxu0
        %v382 = vpop.f32.mrf.mxu0
        %v383 = vadd.f32 %v312, %v382
        %v384 = vpop.f32.mrf.mxu0
        %385 = vmatprep.mubr.bf16.mxu0 0
        %386 = vmatmul.mubr.bf16.gmra.mxu0 %v325
        %v387 = vpop.f32.mrf.mxu0
        %v388 = vadd.f32 %v312, %v387
        %v389 = vpop.f32.mrf.mxu0
        %v390 = vpop.f32.mrf.mxu0
        %v391 = vadd.f32 %v312, %v390
        %v392 = vpop.f32.mrf.mxu0
        %393 = vmatprep.mubr.bf16.mxu0 0
        %394 = vmatmul.mubr.bf16.gmra.mxu0 %v328
        %v395 = vpop.f32.mrf.mxu0
        %v396 = vadd.f32 %v312, %v395
        %v397 = vpop.f32.mrf.mxu0
        %v398 = vpop.f32.mrf.mxu0
        %v399 = vadd.f32 %v312, %v398
        %v400 = vpop.f32.mrf.mxu0
        %401 = vmatprep.mubr.bf16.mxu0 0
        %402 = vmatmul.mubr.bf16.gmra.mxu0 %v331
        %v403 = vpop.f32.mrf.mxu0
        %v404 = vadd.f32 %v312, %v403
        %v405 = vpop.f32.mrf.mxu0
        %v406 = vpop.f32.mrf.mxu0
        %v407 = vadd.f32 %v312, %v406
        %v408 = vpop.f32.mrf.mxu0
        %409 = vmatprep.mubr.bf16.mxu0 0
        %410 = vmatmul.mubr.bf16.gmra.mxu0 %v334
        %v411 = vpop.f32.mrf.mxu0
        %v412 = vadd.f32 %v312, %v411
        %v413 = vpop.f32.mrf.mxu0
        %v414 = vpop.f32.mrf.mxu0
        %v415 = vadd.f32 %v312, %v414
        %v416 = vpop.f32.mrf.mxu0
        %417 = vmatprep.mubr.bf16.mxu0 0
        %418 = vmatmul.mubr.bf16.gmra.mxu0 %v337
        %v419 = vpop.f32.mrf.mxu0
        %v420 = vadd.f32 %v312, %v419
        %v421 = vpop.f32.mrf.mxu0
        %v422 = vpop.f32.mrf.mxu0
        %v423 = vadd.f32 %v312, %v422
        %v424 = vpop.f32.mrf.mxu0
        %425 = vmatprep.mubr.bf16.mxu0 0
        %426 = vmatmul.mubr.bf16.gmra.mxu0 %v340
        %v427 = vpop.f32.mrf.mxu0
        %v428 = vadd.f32 %v312, %v427
        %v429 = vpop.f32.mrf.mxu0
        %v430 = vpop.f32.mrf.mxu0
        %v431 = vadd.f32 %v312, %v430
        %v432 = vpop.f32.mrf.mxu0
        %433 = vmatprep.mubr.bf16.mxu0 0
        %434 = vmatmul.mubr.bf16.gmra.mxu0 %v343
        %v435 = vpop.f32.mrf.mxu0
        %v436 = vadd.f32 %v312, %v435
        %v437 = vpop.f32.mrf.mxu0
        %v438 = vpop.f32.mrf.mxu0
        %v439 = vadd.f32 %v312, %v438
        %v440 = vpop.f32.mrf.mxu0
        %441 = vdwg.mxu0
        %v442 = vmax.f32 %v380, 0.0
        %v443 = vmax.f32 %v383, 0.0
        %v444 = vmax.f32 %v388, 0.0
        %v445 = vmax.f32 %v391, 0.0
        %v446 = vmax.f32 %v396, 0.0
        %v447 = vmax.f32 %v399, 0.0
        %v448 = vmax.f32 %v404, 0.0
        %v449 = vmax.f32 %v407, 0.0
        %v450 = vmax.f32 %v412, 0.0
        %v451 = vmax.f32 %v415, 0.0
        %v452 = vmax.f32 %v420, 0.0
        %v453 = vmax.f32 %v423, 0.0
        %v454 = vmax.f32 %v428, 0.0
        %v455 = vmax.f32 %v431, 0.0
        %v456 = vmax.f32 %v436, 0.0
        %v457 = vmax.f32 %v439, 0.0
        %v458 = vpack.c.bf16 %v443, %v442
        %v459 = vpack.c.bf16 %v445, %v444
        %v460 = vpack.c.bf16 %v447, %v446
        %v461 = vpack.c.bf16 %v449, %v448
        %v462 = vpack.c.bf16 %v451, %v450
        %v463 = vpack.c.bf16 %v453, %v452
        %v464 = vpack.c.bf16 %v455, %v454
        %v465 = vpack.c.bf16 %v457, %v456
        %v466 = vld [vmem:[%s3] sm:$0xf]
        %v467 = vld [vmem:[%s3 + $0x4] sm:$0xf]
        %v468 = vld [vmem:[%s3 + $0x8] sm:$0xf]
        %v469 = vld [vmem:[%s3 + $0xc] sm:$0xf]
        %v470 = vld [vmem:[%s4] sm:$0x1]
        %v472 = vlaneseq
        %v473 = vshrl.u32 %v472, 7
        %v474 = vsub.s32 0, %v473
        %v475 = vrot.slane %v470, %v474
        %v481 = vunpack.c.l.b16 %v466
        %v482 = vunpack.c.l.b16 %v467
        %v483 = vunpack.c.l.b16 %v468
        %v484 = vunpack.c.l.b16 %v469
        %v485 = vpack.c.b16 %v482, %v481
        %v486 = vpack.c.b16 %v484, %v483
        %vm489 = vcmask 261120
        %v491 = vsel %vm489, %v458, 0
        %v494 = vsel %vm489, %v459, 0
        %v497 = vsel %vm489, %v460, 0
        %v500 = vsel %vm489, %v461, 0
        %v503 = vsel %vm489, %v462, 0
        %v506 = vsel %vm489, %v463, 0
        %v509 = vsel %vm489, %v464, 0
        %v512 = vsel %vm489, %v465, 0
        %514 = vmatprep.subr.bf16.mxu0 0
        %515 = vmatpush1.bf16.msra.mxu0 0
        %516 = vmatprep.subr.bf16.mxu0 0
        %517 = vmatpush1.bf16.msra.mxu0 0
        %518 = vmatprep.subr.bf16.mxu0 0
        %519 = vmatpush1.bf16.msra.mxu0 0
        %520 = vmatprep.subr.bf16.mxu0 0
        %521 = vmatpush1.bf16.msra.mxu0 0
        %522 = vmatprep.subr.bf16.mxu0 0
        %523 = vmatpush1.bf16.msra.mxu0 0
        %524 = vmatprep.subr.bf16.mxu0 0
        %525 = vmatpush1.bf16.msra.mxu0 0
        %526 = vmatprep.subr.bf16.mxu0 0
        %527 = vmatpush1.bf16.msra.mxu0 %v486
        %528 = vmatprep.subr.bf16.mxu0 0
        %529 = vmatpush1.bf16.msra.mxu0 %v485
        %530 = vmatprep.subr.bf16.mxu0 0
        %531 = vmatpush2.bf16.msra.mxu0 0
        %532 = vmatprep.subr.bf16.mxu0 0
        %533 = vmatpush2.bf16.msra.mxu0 0
        %534 = vmatprep.subr.bf16.mxu0 0
        %535 = vmatpush2.bf16.msra.mxu0 0
        %536 = vmatprep.subr.bf16.mxu0 0
        %537 = vmatpush2.bf16.msra.mxu0 0
        %538 = vmatprep.subr.bf16.mxu0 0
        %539 = vmatpush2.bf16.msra.mxu0 0
        %540 = vmatprep.subr.bf16.mxu0 0
        %541 = vmatpush2.bf16.msra.mxu0 0
        %542 = vmatprep.subr.bf16.mxu0 0
        %543 = vmatpush2.bf16.msra.mxu0 0
        %544 = vmatprep.subr.bf16.mxu0 0
        %545 = vmatpush2.bf16.msra.mxu0 0
        %546 = vmatprep.mubr.bf16.mxu0 0
        %547 = vmatmul.mubr.bf16.gmra.mxu0 %v491
        %v548 = vpop.f32.mrf.mxu0
        %v549 = vadd.f32 %v475, %v548
        %v550 = vpop.f32.mrf.mxu0
        %v551 = vpop.f32.mrf.mxu0
        %v552 = vadd.f32 %v475, %v551
        %v553 = vpop.f32.mrf.mxu0
        %554 = vmatprep.mubr.bf16.mxu0 0
        %555 = vmatmul.mubr.bf16.gmra.mxu0 %v494
        %v556 = vpop.f32.mrf.mxu0
        %v557 = vadd.f32 %v475, %v556
        %v558 = vpop.f32.mrf.mxu0
        %v559 = vpop.f32.mrf.mxu0
        %v560 = vadd.f32 %v475, %v559
        %v561 = vpop.f32.mrf.mxu0
        %562 = vmatprep.mubr.bf16.mxu0 0
        %563 = vmatmul.mubr.bf16.gmra.mxu0 %v497
        %v564 = vpop.f32.mrf.mxu0
        %v565 = vadd.f32 %v475, %v564
        %v566 = vpop.f32.mrf.mxu0
        %v567 = vpop.f32.mrf.mxu0
        %v568 = vadd.f32 %v475, %v567
        %v569 = vpop.f32.mrf.mxu0
        %570 = vmatprep.mubr.bf16.mxu0 0
        %571 = vmatmul.mubr.bf16.gmra.mxu0 %v500
        %v572 = vpop.f32.mrf.mxu0
        %v573 = vadd.f32 %v475, %v572
        %v574 = vpop.f32.mrf.mxu0
        %v575 = vpop.f32.mrf.mxu0
        %v576 = vadd.f32 %v475, %v575
        %v577 = vpop.f32.mrf.mxu0
        %578 = vmatprep.mubr.bf16.mxu0 0
        %579 = vmatmul.mubr.bf16.gmra.mxu0 %v503
        %v580 = vpop.f32.mrf.mxu0
        %v581 = vadd.f32 %v475, %v580
        %v582 = vpop.f32.mrf.mxu0
        %v583 = vpop.f32.mrf.mxu0
        %v584 = vadd.f32 %v475, %v583
        %v585 = vpop.f32.mrf.mxu0
        %586 = vmatprep.mubr.bf16.mxu0 0
        %587 = vmatmul.mubr.bf16.gmra.mxu0 %v506
        %v588 = vpop.f32.mrf.mxu0
        %v589 = vadd.f32 %v475, %v588
        %v590 = vpop.f32.mrf.mxu0
        %v591 = vpop.f32.mrf.mxu0
        %v592 = vadd.f32 %v475, %v591
        %v593 = vpop.f32.mrf.mxu0
        %594 = vmatprep.mubr.bf16.mxu0 0
        %595 = vmatmul.mubr.bf16.gmra.mxu0 %v509
        %v596 = vpop.f32.mrf.mxu0
        %v597 = vadd.f32 %v475, %v596
        %v598 = vpop.f32.mrf.mxu0
        %v599 = vpop.f32.mrf.mxu0
        %v600 = vadd.f32 %v475, %v599
        %v601 = vpop.f32.mrf.mxu0
        %602 = vmatprep.mubr.bf16.mxu0 0
        %603 = vmatmul.mubr.bf16.gmra.mxu0 %v512
        %v604 = vpop.f32.mrf.mxu0
        %v605 = vadd.f32 %v475, %v604
        %v606 = vpop.f32.mrf.mxu0
        %v607 = vpop.f32.mrf.mxu0
        %v608 = vadd.f32 %v475, %v607
        %v609 = vpop.f32.mrf.mxu0
        %610 = vdwg.mxu0
        %v611 = vmax.f32 %v549, 0.0
        %v612 = vmax.f32 %v552, 0.0
        %v613 = vmax.f32 %v557, 0.0
        %v614 = vmax.f32 %v560, 0.0
        %v615 = vmax.f32 %v565, 0.0
        %v616 = vmax.f32 %v568, 0.0
        %v617 = vmax.f32 %v573, 0.0
        %v618 = vmax.f32 %v576, 0.0
        %v619 = vmax.f32 %v581, 0.0
        %v620 = vmax.f32 %v584, 0.0
        %v621 = vmax.f32 %v589, 0.0
        %v622 = vmax.f32 %v592, 0.0
        %v623 = vmax.f32 %v597, 0.0
        %v624 = vmax.f32 %v600, 0.0
        %v625 = vmax.f32 %v605, 0.0
        %v626 = vmax.f32 %v608, 0.0
        %v627 = vadd.f32 %v442, %v611
        %v628 = vadd.f32 %v443, %v612
        %v629 = vadd.f32 %v444, %v613
        %v630 = vadd.f32 %v445, %v614
        %v631 = vadd.f32 %v446, %v615
        %v632 = vadd.f32 %v447, %v616
        %v633 = vadd.f32 %v448, %v617
        %v634 = vadd.f32 %v449, %v618
        %v635 = vadd.f32 %v450, %v619
        %v636 = vadd.f32 %v451, %v620
        %v637 = vadd.f32 %v452, %v621
        %v638 = vadd.f32 %v453, %v622
        %v639 = vadd.f32 %v454, %v623
        %v640 = vadd.f32 %v455, %v624
        %v641 = vadd.f32 %v456, %v625
        %v642 = vadd.f32 %v457, %v626
        %v643 = vpack.c.bf16 %v628, %v627
        %v644 = vpack.c.bf16 %v630, %v629
        %v645 = vpack.c.bf16 %v632, %v631
        %v646 = vpack.c.bf16 %v634, %v633
        %v647 = vpack.c.bf16 %v636, %v635
        %v648 = vpack.c.bf16 %v638, %v637
        %v649 = vpack.c.bf16 %v640, %v639
        %v650 = vpack.c.bf16 %v642, %v641
        %v651 = vld [vmem:[%s5] sm:$0xf]
        %v652 = vld [vmem:[%s5 + $0x4] sm:$0xf]
        %v653 = vld [vmem:[%s5 + $0x8] sm:$0xf]
        %v654 = vld [vmem:[%s5 + $0xc] sm:$0xf]
        %v655 = vld [vmem:[%s6] sm:$0x1]
        %v657 = vlaneseq
        %v658 = vshrl.u32 %v657, 7
        %v659 = vsub.s32 0, %v658
        %v660 = vrot.slane %v655, %v659
        %v666 = vunpack.c.l.b16 %v651
        %v667 = vunpack.c.l.b16 %v652
        %v668 = vunpack.c.l.b16 %v653
        %v669 = vunpack.c.l.b16 %v654
        %v670 = vpack.c.b16 %v667, %v666
        %v671 = vpack.c.b16 %v669, %v668
        %v675 = vsel %vm489, %v643, 0
        %v678 = vsel %vm489, %v644, 0
        %v681 = vsel %vm489, %v645, 0
        %v684 = vsel %vm489, %v646, 0
        %v687 = vsel %vm489, %v647, 0
        %v690 = vsel %vm489, %v648, 0
        %v693 = vsel %vm489, %v649, 0
        %v696 = vsel %vm489, %v650, 0
        %698 = vmatprep.subr.bf16.mxu0 0
        %699 = vmatpush1.bf16.msra.mxu0 0
        %700 = vmatprep.subr.bf16.mxu0 0
        %701 = vmatpush1.bf16.msra.mxu0 0
        %702 = vmatprep.subr.bf16.mxu0 0
        %703 = vmatpush1.bf16.msra.mxu0 0
        %704 = vmatprep.subr.bf16.mxu0 0
        %705 = vmatpush1.bf16.msra.mxu0 0
        %706 = vmatprep.subr.bf16.mxu0 0
        %707 = vmatpush1.bf16.msra.mxu0 0
        %708 = vmatprep.subr.bf16.mxu0 0
        %709 = vmatpush1.bf16.msra.mxu0 0
        %710 = vmatprep.subr.bf16.mxu0 0
        %711 = vmatpush1.bf16.msra.mxu0 %v671
        %712 = vmatprep.subr.bf16.mxu0 0
        %713 = vmatpush1.bf16.msra.mxu0 %v670
        %714 = vmatprep.subr.bf16.mxu0 0
        %715 = vmatpush2.bf16.msra.mxu0 0
        %716 = vmatprep.subr.bf16.mxu0 0
        %717 = vmatpush2.bf16.msra.mxu0 0
        %718 = vmatprep.subr.bf16.mxu0 0
        %719 = vmatpush2.bf16.msra.mxu0 0
        %720 = vmatprep.subr.bf16.mxu0 0
        %721 = vmatpush2.bf16.msra.mxu0 0
        %722 = vmatprep.subr.bf16.mxu0 0
        %723 = vmatpush2.bf16.msra.mxu0 0
        %724 = vmatprep.subr.bf16.mxu0 0
        %725 = vmatpush2.bf16.msra.mxu0 0
        %726 = vmatprep.subr.bf16.mxu0 0
        %727 = vmatpush2.bf16.msra.mxu0 0
        %728 = vmatprep.subr.bf16.mxu0 0
        %729 = vmatpush2.bf16.msra.mxu0 0
        %730 = vmatprep.mubr.bf16.mxu0 0
        %731 = vmatmul.mubr.bf16.gmra.mxu0 %v675
        %v732 = vpop.f32.mrf.mxu0
        %v733 = vadd.f32 %v660, %v732
        %v734 = vpop.f32.mrf.mxu0
        %v735 = vpop.f32.mrf.mxu0
        %v736 = vadd.f32 %v660, %v735
        %v737 = vpop.f32.mrf.mxu0
        %738 = vmatprep.mubr.bf16.mxu0 0
        %739 = vmatmul.mubr.bf16.gmra.mxu0 %v678
        %v740 = vpop.f32.mrf.mxu0
        %v741 = vadd.f32 %v660, %v740
        %v742 = vpop.f32.mrf.mxu0
        %v743 = vpop.f32.mrf.mxu0
        %v744 = vadd.f32 %v660, %v743
        %v745 = vpop.f32.mrf.mxu0
        %746 = vmatprep.mubr.bf16.mxu0 0
        %747 = vmatmul.mubr.bf16.gmra.mxu0 %v681
        %v748 = vpop.f32.mrf.mxu0
        %v749 = vadd.f32 %v660, %v748
        %v750 = vpop.f32.mrf.mxu0
        %v751 = vpop.f32.mrf.mxu0
        %v752 = vadd.f32 %v660, %v751
        %v753 = vpop.f32.mrf.mxu0
        %754 = vmatprep.mubr.bf16.mxu0 0
        %755 = vmatmul.mubr.bf16.gmra.mxu0 %v684
        %v756 = vpop.f32.mrf.mxu0
        %v757 = vadd.f32 %v660, %v756
        %v758 = vpop.f32.mrf.mxu0
        %v759 = vpop.f32.mrf.mxu0
        %v760 = vadd.f32 %v660, %v759
        %v761 = vpop.f32.mrf.mxu0
        %762 = vmatprep.mubr.bf16.mxu0 0
        %763 = vmatmul.mubr.bf16.gmra.mxu0 %v687
        %v764 = vpop.f32.mrf.mxu0
        %v765 = vadd.f32 %v660, %v764
        %v766 = vpop.f32.mrf.mxu0
        %v767 = vpop.f32.mrf.mxu0
        %v768 = vadd.f32 %v660, %v767
        %v769 = vpop.f32.mrf.mxu0
        %770 = vmatprep.mubr.bf16.mxu0 0
        %771 = vmatmul.mubr.bf16.gmra.mxu0 %v690
        %v772 = vpop.f32.mrf.mxu0
        %v773 = vadd.f32 %v660, %v772
        %v774 = vpop.f32.mrf.mxu0
        %v775 = vpop.f32.mrf.mxu0
        %v776 = vadd.f32 %v660, %v775
        %v777 = vpop.f32.mrf.mxu0
        %778 = vmatprep.mubr.bf16.mxu0 0
        %779 = vmatmul.mubr.bf16.gmra.mxu0 %v693
        %v780 = vpop.f32.mrf.mxu0
        %v781 = vadd.f32 %v660, %v780
        %v782 = vpop.f32.mrf.mxu0
        %v783 = vpop.f32.mrf.mxu0
        %v784 = vadd.f32 %v660, %v783
        %v785 = vpop.f32.mrf.mxu0
        %786 = vmatprep.mubr.bf16.mxu0 0
        %787 = vmatmul.mubr.bf16.gmra.mxu0 %v696
        %v788 = vpop.f32.mrf.mxu0
        %v789 = vadd.f32 %v660, %v788
        %v790 = vpop.f32.mrf.mxu0
        %v791 = vpop.f32.mrf.mxu0
        %v792 = vadd.f32 %v660, %v791
        %v793 = vpop.f32.mrf.mxu0
        %794 = vdwg.mxu0
        %795 = vmax.xlane.f32.xlu0 %v733
        %v796 = vpop.xlane.xlu0 %795
        %797 = vmax.xlane.f32.xlu0 %v736
        %v798 = vpop.xlane.xlu0 %797
        %799 = vmax.xlane.f32.xlu0 %v741
        %v800 = vpop.xlane.xlu0 %799
        %801 = vmax.xlane.f32.xlu0 %v744
        %v802 = vpop.xlane.xlu0 %801
        %803 = vmax.xlane.f32.xlu0 %v749
        %v804 = vpop.xlane.xlu0 %803
        %805 = vmax.xlane.f32.xlu0 %v752
        %v806 = vpop.xlane.xlu0 %805
        %807 = vmax.xlane.f32.xlu0 %v757
        %v808 = vpop.xlane.xlu0 %807
        %809 = vmax.xlane.f32.xlu0 %v760
        %v810 = vpop.xlane.xlu0 %809
        %811 = vmax.xlane.f32.xlu0 %v765
        %v812 = vpop.xlane.xlu0 %811
        %813 = vmax.xlane.f32.xlu0 %v768
        %v814 = vpop.xlane.xlu0 %813
        %815 = vmax.xlane.f32.xlu0 %v773
        %v816 = vpop.xlane.xlu0 %815
        %817 = vmax.xlane.f32.xlu0 %v776
        %v818 = vpop.xlane.xlu0 %817
        %819 = vmax.xlane.f32.xlu0 %v781
        %v820 = vpop.xlane.xlu0 %819
        %821 = vmax.xlane.f32.xlu0 %v784
        %v822 = vpop.xlane.xlu0 %821
        %823 = vmax.xlane.f32.xlu0 %v789
        %v824 = vpop.xlane.xlu0 %823
        %825 = vmax.xlane.f32.xlu0 %v792
        %v826 = vpop.xlane.xlu0 %825
        %v827 = vsub.f32 %v733, %v796
        %v828 = vsub.f32 %v736, %v798
        %v829 = vsub.f32 %v741, %v800
        %v830 = vsub.f32 %v744, %v802
        %v831 = vsub.f32 %v749, %v804
        %v832 = vsub.f32 %v752, %v806
        %v833 = vsub.f32 %v757, %v808
        %v834 = vsub.f32 %v760, %v810
        %v835 = vsub.f32 %v765, %v812
        %v836 = vsub.f32 %v768, %v814
        %v837 = vsub.f32 %v773, %v816
        %v838 = vsub.f32 %v776, %v818
        %v839 = vsub.f32 %v781, %v820
        %v840 = vsub.f32 %v784, %v822
        %v841 = vsub.f32 %v789, %v824
        %v842 = vsub.f32 %v792, %v826
        %v843 = vmul.f32 %v827, 1.442695
        %v844 = vpow.pop %v843
        %v845 = vmul.f32 %v828, 1.442695
        %v846 = vpow.pop %v845
        %v847 = vmul.f32 %v829, 1.442695
        %v848 = vpow.pop %v847
        %v849 = vmul.f32 %v830, 1.442695
        %v850 = vpow.pop %v849
        %v851 = vmul.f32 %v831, 1.442695
        %v852 = vpow.pop %v851
        %v853 = vmul.f32 %v832, 1.442695
        %v854 = vpow.pop %v853
        %v855 = vmul.f32 %v833, 1.442695
        %v856 = vpow.pop %v855
        %v857 = vmul.f32 %v834, 1.442695
        %v858 = vpow.pop %v857
        %v859 = vmul.f32 %v835, 1.442695
        %v860 = vpow.pop %v859
        %v861 = vmul.f32 %v836, 1.442695
        %v862 = vpow.pop %v861
        %v863 = vmul.f32 %v837, 1.442695
        %v864 = vpow.pop %v863
        %v865 = vmul.f32 %v838, 1.442695
        %v866 = vpow.pop %v865
        %v867 = vmul.f32 %v839, 1.442695
        %v868 = vpow.pop %v867
        %v869 = vmul.f32 %v840, 1.442695
        %v870 = vpow.pop %v869
        %v871 = vmul.f32 %v841, 1.442695
        %v872 = vpow.pop %v871
        %v873 = vmul.f32 %v842, 1.442695
        %v874 = vpow.pop %v873
        %875 = vadd.xlane.f32.xlu0 %v844
        %v876 = vpop.xlane.xlu0 %875
        %877 = vadd.xlane.f32.xlu0 %v846
        %v878 = vpop.xlane.xlu0 %877
        %879 = vadd.xlane.f32.xlu0 %v848
        %v880 = vpop.xlane.xlu0 %879
        %881 = vadd.xlane.f32.xlu0 %v850
        %v882 = vpop.xlane.xlu0 %881
        %883 = vadd.xlane.f32.xlu0 %v852
        %v884 = vpop.xlane.xlu0 %883
        %885 = vadd.xlane.f32.xlu0 %v854
        %v886 = vpop.xlane.xlu0 %885
        %887 = vadd.xlane.f32.xlu0 %v856
        %v888 = vpop.xlane.xlu0 %887
        %889 = vadd.xlane.f32.xlu0 %v858
        %v890 = vpop.xlane.xlu0 %889
        %891 = vadd.xlane.f32.xlu0 %v860
        %v892 = vpop.xlane.xlu0 %891
        %893 = vadd.xlane.f32.xlu0 %v862
        %v894 = vpop.xlane.xlu0 %893
        %895 = vadd.xlane.f32.xlu0 %v864
        %v896 = vpop.xlane.xlu0 %895
        %897 = vadd.xlane.f32.xlu0 %v866
        %v898 = vpop.xlane.xlu0 %897
        %899 = vadd.xlane.f32.xlu0 %v868
        %v900 = vpop.xlane.xlu0 %899
        %901 = vadd.xlane.f32.xlu0 %v870
        %v902 = vpop.xlane.xlu0 %901
        %903 = vadd.xlane.f32.xlu0 %v872
        %v904 = vpop.xlane.xlu0 %903
        %905 = vadd.xlane.f32.xlu0 %v874
        %v906 = vpop.xlane.xlu0 %905
        %v907 = vlog2.pop %v876
        %v908 = vmul.f32 %v907, 0.6931472
        %v909 = vlog2.pop %v878
        %v910 = vmul.f32 %v909, 0.6931472
        %v911 = vlog2.pop %v880
        %v912 = vmul.f32 %v911, 0.6931472
        %v913 = vlog2.pop %v882
        %v914 = vmul.f32 %v913, 0.6931472
        %v915 = vlog2.pop %v884
        %v916 = vmul.f32 %v915, 0.6931472
        %v917 = vlog2.pop %v886
        %v918 = vmul.f32 %v917, 0.6931472
        %v919 = vlog2.pop %v888
        %v920 = vmul.f32 %v919, 0.6931472
        %v921 = vlog2.pop %v890
        %v922 = vmul.f32 %v921, 0.6931472
        %v923 = vlog2.pop %v892
        %v924 = vmul.f32 %v923, 0.6931472
        %v925 = vlog2.pop %v894
        %v926 = vmul.f32 %v925, 0.6931472
        %v927 = vlog2.pop %v896
        %v928 = vmul.f32 %v927, 0.6931472
        %v929 = vlog2.pop %v898
        %v930 = vmul.f32 %v929, 0.6931472
        %v931 = vlog2.pop %v900
        %v932 = vmul.f32 %v931, 0.6931472
        %v933 = vlog2.pop %v902
        %v934 = vmul.f32 %v933, 0.6931472
        %v935 = vlog2.pop %v904
        %v936 = vmul.f32 %v935, 0.6931472
        %v937 = vlog2.pop %v906
        %v938 = vmul.f32 %v937, 0.6931472
        %v939 = vsub.f32 %v827, %v908
        %v940 = vsub.f32 %v828, %v910
        %v941 = vsub.f32 %v829, %v912
        %v942 = vsub.f32 %v830, %v914
        %v943 = vsub.f32 %v831, %v916
        %v944 = vsub.f32 %v832, %v918
        %v945 = vsub.f32 %v833, %v920
        %v946 = vsub.f32 %v834, %v922
        %v947 = vsub.f32 %v835, %v924
        %v948 = vsub.f32 %v836, %v926
        %v949 = vsub.f32 %v837, %v928
        %v950 = vsub.f32 %v838, %v930
        %v951 = vsub.f32 %v839, %v932
        %v952 = vsub.f32 %v840, %v934
        %v953 = vsub.f32 %v841, %v936
        %v954 = vsub.f32 %v842, %v938
        %955 = vst [vmem:[%s272] sm:$0xff] %v939
        %956 = vst [vmem:[%s272 + $0x8] sm:$0xff] %v940
        %957 = vst [vmem:[%s272 + $0x10] sm:$0xff] %v941
        %958 = vst [vmem:[%s272 + $0x18] sm:$0xff] %v942
        %959 = vst [vmem:[%s272 + $0x20] sm:$0xff] %v943
        %960 = vst [vmem:[%s272 + $0x28] sm:$0xff] %v944
        %961 = vst [vmem:[%s272 + $0x30] sm:$0xff] %v945
        %962 = vst [vmem:[%s272 + $0x38] sm:$0xff] %v946
        %963 = vst [vmem:[%s272 + $0x40] sm:$0xff] %v947
        %964 = vst [vmem:[%s272 + $0x48] sm:$0xff] %v948
        %965 = vst [vmem:[%s272 + $0x50] sm:$0xff] %v949
        %966 = vst [vmem:[%s272 + $0x58] sm:$0xff] %v950
        %967 = vst [vmem:[%s272 + $0x60] sm:$0xff] %v951
        %968 = vst [vmem:[%s272 + $0x68] sm:$0xff] %v952
        %969 = vst [vmem:[%s272 + $0x70] sm:$0xff] %v953
        %970 = vst [vmem:[%s272 + $0x78] sm:$0xff] %v954
        %s971 = sand.u32 %s181, 1
        %s972 = scalar_lea.sflag [#allocation3], %s971
        %s973 = sand.u32 %s181, 1
        %s974 = smul.addr %s973, 128
        %s975 = scalar_lea.vmem [#allocation2], %s974
        // Predicated region
        $region49: #{tpu_custom_call.1} parent=47 // pred_check
          %p976 = pneg %p191
        $region50: #{tpu_custom_call.1} parent=47 // pred_check_branch
          %978 = sbr.rel (%p976) target = $region52
        $region51: #{tpu_custom_call.1} parent=47 // pred_region
          %s979 = smul.u32 16, %s21
          %s981 = ssub.s32 2048, 2048
          %982 = vsyncadd %s972, %s981
          %s983 = smul.addr %s979, 128
          %s984 = scalar_lea.hbm %s7, %s983
          %s985 = sshll.u32 %s975, 4
          %s986 = int_to_ptr.vmem [resolvable:$true] %s985
          %991 = dma.vmem_to_hbm [thread:$0]  %s986, 2048, %s984, %s972, 128, 128, 8
        $region52: #{tpu_custom_call.1} parent=47 // pred_fallthru
          _
      $region48: #{tpu_custom_call.1} parent=5 // pred_fallthru
        _
      %p992 = scmp.le.s32.totalorder 2, %s16
      // Predicated region
      $region53: #{tpu_custom_call.1} parent=5 // pred_check
        %p993 = pneg %p992
      $region54: #{tpu_custom_call.1} parent=5 // pred_check_branch
        %995 = sbr.rel (%p993) target = $region56
      $region55: #{tpu_custom_call.1} parent=5 // pred_region
        %s996 = ssub.s32 %s16, 2
        // Predicated region
        $region57: #{tpu_custom_call.1} parent=55 // pred_check
          %p997 = pneg %p197
        $region58: #{tpu_custom_call.1} parent=55 // pred_check_branch
          %999 = sbr.rel (%p997) target = $region60
        $region59: #{tpu_custom_call.1} parent=55 // pred_region
          %s1000 = sand.u32 %s182, 1
          %s1001 = scalar_lea.sflag [#allocation3], %s1000
          %s1002 = sand.u32 %s182, 1
          %s1003 = smul.addr %s1002, 128
          %s1004 = scalar_lea.vmem [#allocation2], %s1003
          %1005 = dma.done %s1001, 2048
        $region60: #{tpu_custom_call.1} parent=55 // pred_fallthru
          _
      $region56: #{tpu_custom_call.1} parent=5 // pred_fallthru
        _
    $region6: #{tpu_custom_call.1} parent=1 // loop_footer
      %s20 = sadd.s32 1, %s16
    $region7: #{tpu_custom_call.1} parent=1 // loop_footer_branch
      %15 = sbr.rel target = $region3
    $region8: #{tpu_custom_call.1} parent=1 // loop_exit
      _
    %1006 = vsyncpa [#allocation3], 1
    %s1007 = scalar_lea.sflag [#allocation3], 1
    %1008 = vsyncpa %s1007, 1

</llo_original>
